<compile_context>
chip_gen: v7x
topology: tpu7x:2x2x1
jax: 0.10.0
libtpu: 0.0.40
codegen_flags: <defaults>
</compile_context>

<pallas_src>
import jax
import jax.numpy as jnp
from jax.experimental import pallas as pl
from jax.experimental.pallas import tpu as pltpu

SELU_ALPHA = 1.6732632423543772848170429916717
SELU_SCALE = 1.0507009873554804934193349852946


def _selu(x):
    # exp() is clamped so the (discarded) positive branch can never overflow.
    return SELU_SCALE * jnp.where(
        x > 0, x, SELU_ALPHA * (jnp.exp(jnp.minimum(x, 0.0)) - 1.0))


def _fused_unetconv2_kernel(x_ref, w1_ref, b1_ref, w2_ref, b2_ref, o_ref,
                            xpad_ref, apad_ref):
    """Nb batch images: [3x3 reflect conv + SELU] x 2, entirely in VMEM.

    x_ref : (Nb, H, W*C0)        lane-folded input rows
    w1_ref: (KH, W*C0, W*C1)     bf16 banded weights (KW taps + reflect columns folded)
    b1_ref: (1, W*C1)            f32
    w2_ref: (KH, W*C1, W*C2)     bf16
    b2_ref: (1, W*C2)            f32
    o_ref : (Nb, H, W*C2)
    xpad_ref: (Nb*HpR, W*C0) f32 scratch -> stacked row-reflect-padded layer-1 input
    apad_ref: (Nb*HpR, W*C1) f32 scratch -> stacked row-reflect-padded layer-1 activation
    """
    Nb, H, _ = x_ref.shape
    KH = w1_ref.shape[0]
    pad = (KH - 1) // 2
    HpR = xpad_ref.shape[0] // Nb          # per-image padded rows, rounded up to 8
    Hp = H + 2 * pad

    def fill_padded(pad_ref, i, rows):
        """Write image i's interior rows + reflected row halo into the stacked scratch."""
        base = i * HpR
        pad_ref[base + pad:base + pad + H, :] = rows
        for r in range(pad):
            # reflect (PyTorch 'reflect': mirror excluding the edge row)
            pad_ref[base + pad - 1 - r:base + pad - r, :] = rows[r + 1:r + 2, :]
            pad_ref[base + pad + H + r:base + pad + H + r + 1, :] = (
                rows[H - 2 - r:H - 1 - r, :])
        if HpR > Hp:
            # sublane-alignment filler rows: zero them once; their matmul output rows
            # are never read below.
            pad_ref[base + Hp:base + HpR, :] = jnp.zeros(
                (HpR - Hp, pad_ref.shape[1]), pad_ref.dtype)

    def conv_selu(pad_ref, w_ref, b_ref):
        """KH full-stack matmuls (M = Nb*HpR) -> per-image shifted-slice sum -> SELU."""
        wc_out = w_ref.shape[2]
        # bf16 MXU operands, f32 accumulation.
        stack_bf16 = pad_ref[...].astype(jnp.bfloat16)
        res = [jnp.dot(stack_bf16, w_ref[dy], preferred_element_type=jnp.float32)
               for dy in range(KH)]
        b_bcast = jnp.broadcast_to(b_ref[...], (H, wc_out))   # hoisted once per layer
        outs = []
        for i in range(Nb):
            base = i * HpR
            acc = res[0][base:base + H, :]                     # dy=0 initializes acc
            for dy in range(1, KH):
                acc = acc + res[dy][base + dy:base + dy + H, :]
            outs.append(_selu(acc + b_bcast))                  # f32 bias/SELU math
        return outs

    # Layer 1
    for i in range(Nb):
        fill_padded(xpad_ref, i, x_ref[i])
    h1 = conv_selu(xpad_ref, w1_ref, b1_ref)

    # Layer 2 (activation stays in VMEM, re-padded in place)
    for i in range(Nb):
        fill_padded(apad_ref, i, h1[i])
    h2 = conv_selu(apad_ref, w2_ref, b2_ref)

    for i in range(Nb):
        o_ref[i] = h2[i].astype(o_ref.dtype)


def _build_banded_weights(w, W, pad):
    """Fold KW taps + reflect column padding of a conv weight into per-dy banded
    matmul matrices.

    w: (KH, KW, Cin, Cout) -> (KH, W*Cin, W*Cout) with
       B[dy, xr*Cin+ci, x*Cout+co] = sum_{dx : reflect(x+dx-pad) == xr} w[dy,dx,ci,co]
    """
    KH, KW, Cin, Cout = w.shape
    xs = jnp.arange(W)
    bands = []
    for dy in range(KH):
        bdy = jnp.zeros((W, Cin, W, Cout), jnp.float32)
        for dx in range(KW):
            src = xs + dx - pad
            src = jnp.where(src < 0, -src, src)                    # reflect left
            src = jnp.where(src > W - 1, 2 * (W - 1) - src, src)   # reflect right
            sel = (xs[:, None] == src[None, :]).astype(jnp.float32)  # (xr, x)
            bdy = bdy + sel[:, None, :, None] * w[dy, dx][None, :, None, :]
        bands.append(bdy.reshape(W * Cin, W * Cout))
    return jnp.stack(bands, axis=0)


def prepare_unet_conv2_params(params, W):
    """One-time weight preprocessing (outside the per-step forward).  Banded weights
    are stored in bf16 (native MXU rate, half the DMA/VMEM); biases stay f32."""
    prepared = []
    for (w, b) in params:
        pad = (w.shape[0] - 1) // 2
        cout = w.shape[3]
        banded = _build_banded_weights(w, W, pad).astype(jnp.bfloat16)
        bias = jnp.tile(b, W).reshape(1, W * cout).astype(jnp.float32)
        prepared.append((banded, bias))
    return tuple(prepared)


def _round_up(x, m):
    return (x + m - 1) // m * m


def _pick_batch_block(N, hpr, target_rows=256):
    """Largest divisor of N whose stacked padded rows stay within ~one MXU M pass."""
    nb = max(1, min(N, target_rows // max(hpr, 1)))
    while N % nb:
        nb -= 1
    return nb


def unet_conv2_forward_folded(x_fold, prepared):
    """unetConv2 forward on lane-folded activations: (N, H, W*C0) -> (N, H, W*C2).
    Keep consecutive UNet blocks in this layout to avoid NCHW transposes in HBM."""
    (bw1, bb1), (bw2, bb2) = prepared
    N, H, WC0 = x_fold.shape
    KH = bw1.shape[0]
    pad = (KH - 1) // 2
    WC1 = bw1.shape[2]
    WC2 = bw2.shape[2]

    hpr = _round_up(H + 2 * pad, 8)
    Nb = _pick_batch_block(N, hpr)

    return pl.pallas_call(
        _fused_unetconv2_kernel,
        out_shape=jax.ShapeDtypeStruct((N, H, WC2), x_fold.dtype),
        grid=(N // Nb,),
        in_specs=[
            pl.BlockSpec((Nb, H, WC0), lambda g: (g, 0, 0)),
            # Constant-index blocks (weights/biases): fetched once; with >1 grid step,
            # pipeline_mode=pl.Buffered(1) would halve their VMEM residency.
            pl.BlockSpec((KH, WC0, WC1), lambda g: (0, 0, 0)),
            pl.BlockSpec((1, WC1), lambda g: (0, 0)),
            pl.BlockSpec((KH, WC1, WC2), lambda g: (0, 0, 0)),
            pl.BlockSpec((1, WC2), lambda g: (0, 0)),
        ],
        out_specs=pl.BlockSpec((Nb, H, WC2), lambda g: (g, 0, 0)),
        scratch_shapes=[
            pltpu.VMEM((Nb * hpr, WC0), jnp.float32),
            pltpu.VMEM((Nb * hpr, WC1), jnp.float32),
        ],
        compiler_params=pltpu.CompilerParams(
            # On v7x, pltpu.CORE_PARALLEL (with >=2 grid steps) would shard this axis
            # across the two TensorCores; plain "parallel" is kept for portability.
            dimension_semantics=("parallel",),
            vmem_limit_bytes=32 * 1024 * 1024,
        ),
    )(x_fold, bw1, bb1, bw2, bb2)


@jax.jit
def unet_conv2_forward(x_nchw, prepared):
    """unetConv2 forward.  x_nchw: (N, Cin, H, W) -> (N, Cout, H, W)."""
    N, C0, H, W = x_nchw.shape
    C2 = prepared[1][0].shape[2] // W

    # NCHW -> lane-folded (N, H, W*C0).  (For chained blocks, call
    # unet_conv2_forward_folded directly and skip these HBM transposes.)
    x_fold = jnp.transpose(x_nchw, (0, 2, 3, 1)).reshape(N, H, W * C0)
    out_fold = unet_conv2_forward_folded(x_fold, prepared)
    return jnp.transpose(out_fold.reshape(N, H, W, C2), (0, 3, 1, 2))


def init_unet_conv2_params(key, in_size, out_size, n=2, ks=3):
    """kaiming_normal_(a=0, fan_in) conv weights + PyTorch-default uniform bias."""
    params = []
    cin = in_size
    for _ in range(n):
        key, kw_key, kb_key = jax.random.split(key, 3)
        fan_in = cin * ks * ks
        std = (2.0 / fan_in) ** 0.5
        w = std * jax.random.normal(kw_key, (ks, ks, cin, out_size), jnp.float32)
        bound = 1.0 / (fan_in ** 0.5)
        b = jax.random.uniform(kb_key, (out_size,), jnp.float32, -bound, bound)
        params.append((w, b))
        cin = out_size
    return params


def unet_conv2_reference(x_nchw, params):
    """Pure-JAX/XLA f32 reference (reflect-pad conv + SELU), matching the PyTorch module."""
    y = x_nchw
    for (w, b) in params:
        pad = (w.shape[0] - 1) // 2
        yp = jnp.pad(y, ((0, 0), (0, 0), (pad, pad), (pad, pad)), mode="reflect")
        y = jax.lax.conv_general_dilated(
            yp, w, window_strides=(1, 1), padding="VALID",
            dimension_numbers=("NCHW", "HWIO", "NCHW"))
        y = y + b[None, :, None, None]
        y = _selu(y)
    return y


if __name__ == "__main__":
    key = jax.random.PRNGKey(0)
    k_x, k_p = jax.random.split(key)

    N, Cin, H, W = 2, 4, 16, 16
    Cout = 8
    x = jax.random.normal(k_x, (N, Cin, H, W), jnp.float32)

    params = init_unet_conv2_params(k_p, in_size=Cin, out_size=Cout, n=2, ks=3)
    prepared = prepare_unet_conv2_params(params, W)

    out = jax.block_until_ready(unet_conv2_forward(x, prepared))

    assert out.shape == (N, Cout, H, W), out.shape
    assert bool(jnp.all(jnp.isfinite(out)))

    ref = jax.block_until_ready(unet_conv2_reference(x, params))
    rel_err = float(jnp.max(jnp.abs(out - ref)) / (jnp.max(jnp.abs(ref)) + 1e-6))
    # Tightened bound: meaningful for bf16 MXU operands + f32 accumulation.
    assert rel_err < 2e-2, f"kernel vs reference mismatch: rel_err={rel_err}"

    print("KERNEL_OK")
</pallas_src>

<mosaic_0001>
module attributes {stable_mosaic.version = 11 : i64} {
  func.func @_fused_unetconv2_kernel(%arg0: i32, %arg1: memref<2x16x64xf32, #tpu.memory_space<vmem>>, %arg2: memref<3x64x128xbf16, #tpu.memory_space<vmem>>, %arg3: memref<1x128xf32, #tpu.memory_space<vmem>>, %arg4: memref<3x128x128xbf16, #tpu.memory_space<vmem>>, %arg5: memref<1x128xf32, #tpu.memory_space<vmem>>, %arg6: memref<2x16x128xf32, #tpu.memory_space<vmem>>, %arg7: memref<48x64xf32, #tpu.memory_space<vmem>>, %arg8: memref<48x128xf32, #tpu.memory_space<vmem>>) attributes {dimension_semantics = [#tpu.dimension_semantics<parallel>], iteration_bounds = array<i64: 1>, scalar_prefetch = 0 : i64, scratch_operands = 2 : i64, tpu.core_type = #tpu.core_type<tc>, window_params = [{transform_indices = @transform_0, window_bounds = array<i64: 2, 16, 64>}, {pipeline_mode = #tpu.pipeline_mode<synchronous>, transform_indices = @transform_1, window_bounds = array<i64: 3, 64, 128>}, {pipeline_mode = #tpu.pipeline_mode<synchronous>, transform_indices = @transform_2, window_bounds = array<i64: 1, 128>}, {pipeline_mode = #tpu.pipeline_mode<synchronous>, transform_indices = @transform_3, window_bounds = array<i64: 3, 128, 128>}, {pipeline_mode = #tpu.pipeline_mode<synchronous>, transform_indices = @transform_4, window_bounds = array<i64: 1, 128>}, {transform_indices = @transform_5, window_bounds = array<i64: 2, 16, 128>}]} {
    %c0 = arith.constant 0 : index
    %c0_0 = arith.constant 0 : index
    %c0_1 = arith.constant 0 : index
    %0 = vector.load %arg1[%c0, %c0_0, %c0_1] : memref<2x16x64xf32, #tpu.memory_space<vmem>>, vector<1x16x64xf32>
    %1 = vector.shape_cast %0 : vector<1x16x64xf32> to vector<16x64xf32>
    %c1 = arith.constant 1 : index
    %c0_2 = arith.constant 0 : index
    %2 = vector.load %arg7[%c1, %c0_2] : memref<48x64xf32, #tpu.memory_space<vmem>>, vector<16x64xf32>
    tpu.vector_store %arg7[%c1, %c0_2], %1 {strides = array<i32>} : memref<48x64xf32, #tpu.memory_space<vmem>>, vector<16x64xf32>,
    %3 = vector.extract_strided_slice %1 {offsets = [1, 0], sizes = [1, 64], strides = [1, 1]} : vector<16x64xf32> to vector<1x64xf32>
    %c0_3 = arith.constant 0 : index
    %c0_4 = arith.constant 0 : index
    %4 = vector.load %arg7[%c0_3, %c0_4] : memref<48x64xf32, #tpu.memory_space<vmem>>, vector<1x64xf32>
    tpu.vector_store %arg7[%c0_3, %c0_4], %3 {strides = array<i32>} : memref<48x64xf32, #tpu.memory_space<vmem>>, vector<1x64xf32>,
    %5 = vector.extract_strided_slice %1 {offsets = [14, 0], sizes = [1, 64], strides = [1, 1]} : vector<16x64xf32> to vector<1x64xf32>
    %c17 = arith.constant 17 : index
    %c0_5 = arith.constant 0 : index
    %6 = vector.load %arg7[%c17, %c0_5] : memref<48x64xf32, #tpu.memory_space<vmem>>, vector<1x64xf32>
    tpu.vector_store %arg7[%c17, %c0_5], %5 {strides = array<i32>} : memref<48x64xf32, #tpu.memory_space<vmem>>, vector<1x64xf32>,
    %cst = arith.constant 0.000000e+00 : f32
    %7 = vector.broadcast %cst : f32 to vector<6x64xf32>
    %c18 = arith.constant 18 : index
    %c0_6 = arith.constant 0 : index
    %8 = vector.load %arg7[%c18, %c0_6] : memref<48x64xf32, #tpu.memory_space<vmem>>, vector<6x64xf32>
    tpu.vector_store %arg7[%c18, %c0_6], %7 {strides = array<i32>} : memref<48x64xf32, #tpu.memory_space<vmem>>, vector<6x64xf32>,
    %c1_7 = arith.constant 1 : index
    %c0_8 = arith.constant 0 : index
    %c0_9 = arith.constant 0 : index
    %9 = vector.load %arg1[%c1_7, %c0_8, %c0_9] : memref<2x16x64xf32, #tpu.memory_space<vmem>>, vector<1x16x64xf32>
    %10 = vector.shape_cast %9 : vector<1x16x64xf32> to vector<16x64xf32>
    %c25 = arith.constant 25 : index
    %c0_10 = arith.constant 0 : index
    %11 = vector.load %arg7[%c25, %c0_10] : memref<48x64xf32, #tpu.memory_space<vmem>>, vector<16x64xf32>
    tpu.vector_store %arg7[%c25, %c0_10], %10 {strides = array<i32>} : memref<48x64xf32, #tpu.memory_space<vmem>>, vector<16x64xf32>,
    %12 = vector.extract_strided_slice %10 {offsets = [1, 0], sizes = [1, 64], strides = [1, 1]} : vector<16x64xf32> to vector<1x64xf32>
    %c24 = arith.constant 24 : index
    %c0_11 = arith.constant 0 : index
    %13 = vector.load %arg7[%c24, %c0_11] : memref<48x64xf32, #tpu.memory_space<vmem>>, vector<1x64xf32>
    tpu.vector_store %arg7[%c24, %c0_11], %12 {strides = array<i32>} : memref<48x64xf32, #tpu.memory_space<vmem>>, vector<1x64xf32>,
    %14 = vector.extract_strided_slice %10 {offsets = [14, 0], sizes = [1, 64], strides = [1, 1]} : vector<16x64xf32> to vector<1x64xf32>
    %c41 = arith.constant 41 : index
    %c0_12 = arith.constant 0 : index
    %15 = vector.load %arg7[%c41, %c0_12] : memref<48x64xf32, #tpu.memory_space<vmem>>, vector<1x64xf32>
    tpu.vector_store %arg7[%c41, %c0_12], %14 {strides = array<i32>} : memref<48x64xf32, #tpu.memory_space<vmem>>, vector<1x64xf32>,
    %cst_13 = arith.constant 0.000000e+00 : f32
    %16 = vector.broadcast %cst_13 : f32 to vector<6x64xf32>
    %c42 = arith.constant 42 : index
    %c0_14 = arith.constant 0 : index
    %17 = vector.load %arg7[%c42, %c0_14] : memref<48x64xf32, #tpu.memory_space<vmem>>, vector<6x64xf32>
    tpu.vector_store %arg7[%c42, %c0_14], %16 {strides = array<i32>} : memref<48x64xf32, #tpu.memory_space<vmem>>, vector<6x64xf32>,
    %c0_15 = arith.constant 0 : index
    %c0_16 = arith.constant 0 : index
    %18 = vector.load %arg7[%c0_15, %c0_16] : memref<48x64xf32, #tpu.memory_space<vmem>>, vector<48x64xf32>
    %19 = arith.truncf %18 : vector<48x64xf32> to vector<48x64xbf16>
    %c0_17 = arith.constant 0 : index
    %c0_18 = arith.constant 0 : index
    %c0_19 = arith.constant 0 : index
    %20 = vector.load %arg2[%c0_17, %c0_18, %c0_19] : memref<3x64x128xbf16, #tpu.memory_space<vmem>>, vector<1x64x128xbf16>
    %21 = vector.shape_cast %20 : vector<1x64x128xbf16> to vector<64x128xbf16>
    %cst_20 = arith.constant dense<0.000000e+00> : vector<48x128xf32>
    %22 = tpu.matmul %19, %21, %cst_20 {dimension_numbers = #tpu.dot_dimension_numbers<[1], [0], [0], [1], [0, 0, 1, 1], [], []>} : vector<48x64xbf16>, vector<64x128xbf16>, vector<48x128xf32> -> vector<48x128xf32>
    %c1_21 = arith.constant 1 : index
    %c0_22 = arith.constant 0 : index
    %c0_23 = arith.constant 0 : index
    %23 = vector.load %arg2[%c1_21, %c0_22, %c0_23] : memref<3x64x128xbf16, #tpu.memory_space<vmem>>, vector<1x64x128xbf16>
    %24 = vector.shape_cast %23 : vector<1x64x128xbf16> to vector<64x128xbf16>
    %cst_24 = arith.constant dense<0.000000e+00> : vector<48x128xf32>
    %25 = tpu.matmul %19, %24, %cst_24 {dimension_numbers = #tpu.dot_dimension_numbers<[1], [0], [0], [1], [0, 0, 1, 1], [], []>} : vector<48x64xbf16>, vector<64x128xbf16>, vector<48x128xf32> -> vector<48x128xf32>
    %c2 = arith.constant 2 : index
    %c0_25 = arith.constant 0 : index
    %c0_26 = arith.constant 0 : index
    %26 = vector.load %arg2[%c2, %c0_25, %c0_26] : memref<3x64x128xbf16, #tpu.memory_space<vmem>>, vector<1x64x128xbf16>
    %27 = vector.shape_cast %26 : vector<1x64x128xbf16> to vector<64x128xbf16>
    %cst_27 = arith.constant dense<0.000000e+00> : vector<48x128xf32>
    %28 = tpu.matmul %19, %27, %cst_27 {dimension_numbers = #tpu.dot_dimension_numbers<[1], [0], [0], [1], [0, 0, 1, 1], [], []>} : vector<48x64xbf16>, vector<64x128xbf16>, vector<48x128xf32> -> vector<48x128xf32>
    %c0_28 = arith.constant 0 : index
    %c0_29 = arith.constant 0 : index
    %29 = vector.load %arg3[%c0_28, %c0_29] : memref<1x128xf32, #tpu.memory_space<vmem>>, vector<1x128xf32>
    %30 = vector.shape_cast %29 : vector<1x128xf32> to vector<1x128xf32>
    %31 = vector.broadcast %30 : vector<1x128xf32> to vector<16x128xf32>
    %32 = vector.extract_strided_slice %22 {offsets = [0, 0], sizes = [16, 128], strides = [1, 1]} : vector<48x128xf32> to vector<16x128xf32>
    %33 = vector.extract_strided_slice %25 {offsets = [1, 0], sizes = [16, 128], strides = [1, 1]} : vector<48x128xf32> to vector<16x128xf32>
    %34 = arith.addf %32, %33 : vector<16x128xf32>
    %35 = vector.extract_strided_slice %28 {offsets = [2, 0], sizes = [16, 128], strides = [1, 1]} : vector<48x128xf32> to vector<16x128xf32>
    %36 = arith.addf %34, %35 : vector<16x128xf32>
    %37 = arith.addf %36, %31 : vector<16x128xf32>
    %cst_30 = arith.constant 0.000000e+00 : f32
    %38 = vector.broadcast %cst_30 : f32 to vector<16x128xf32>
    %39 = arith.cmpf ogt, %37, %38 : vector<16x128xf32>
    %cst_31 = arith.constant 0.000000e+00 : f32
    %40 = vector.broadcast %cst_31 : f32 to vector<16x128xf32>
    %41 = arith.minimumf %37, %40 : vector<16x128xf32>
    %42 = math.exp %41 : vector<16x128xf32>
    %cst_32 = arith.constant 1.000000e+00 : f32
    %43 = vector.broadcast %cst_32 : f32 to vector<16x128xf32>
    %44 = arith.subf %42, %43 : vector<16x128xf32>
    %cst_33 = arith.constant 1.67326319 : f32
    %45 = vector.broadcast %cst_33 : f32 to vector<16x128xf32>
    %46 = arith.mulf %45, %44 : vector<16x128xf32>
    %47 = arith.select %39, %37, %46 : vector<16x128xi1>, vector<16x128xf32>
    %cst_34 = arith.constant 1.05070102 : f32
    %48 = vector.broadcast %cst_34 : f32 to vector<16x128xf32>
    %49 = arith.mulf %48, %47 : vector<16x128xf32>
    %50 = vector.extract_strided_slice %22 {offsets = [24, 0], sizes = [16, 128], strides = [1, 1]} : vector<48x128xf32> to vector<16x128xf32>
    %51 = vector.extract_strided_slice %25 {offsets = [25, 0], sizes = [16, 128], strides = [1, 1]} : vector<48x128xf32> to vector<16x128xf32>
    %52 = arith.addf %50, %51 : vector<16x128xf32>
    %53 = vector.extract_strided_slice %28 {offsets = [26, 0], sizes = [16, 128], strides = [1, 1]} : vector<48x128xf32> to vector<16x128xf32>
    %54 = arith.addf %52, %53 : vector<16x128xf32>
    %55 = arith.addf %54, %31 : vector<16x128xf32>
    %cst_35 = arith.constant 0.000000e+00 : f32
    %56 = vector.broadcast %cst_35 : f32 to vector<16x128xf32>
    %57 = arith.cmpf ogt, %55, %56 : vector<16x128xf32>
    %cst_36 = arith.constant 0.000000e+00 : f32
    %58 = vector.broadcast %cst_36 : f32 to vector<16x128xf32>
    %59 = arith.minimumf %55, %58 : vector<16x128xf32>
    %60 = math.exp %59 : vector<16x128xf32>
    %cst_37 = arith.constant 1.000000e+00 : f32
    %61 = vector.broadcast %cst_37 : f32 to vector<16x128xf32>
    %62 = arith.subf %60, %61 : vector<16x128xf32>
    %cst_38 = arith.constant 1.67326319 : f32
    %63 = vector.broadcast %cst_38 : f32 to vector<16x128xf32>
    %64 = arith.mulf %63, %62 : vector<16x128xf32>
    %65 = arith.select %57, %55, %64 : vector<16x128xi1>, vector<16x128xf32>
    %cst_39 = arith.constant 1.05070102 : f32
    %66 = vector.broadcast %cst_39 : f32 to vector<16x128xf32>
    %67 = arith.mulf %66, %65 : vector<16x128xf32>
    %c1_40 = arith.constant 1 : index
    %c0_41 = arith.constant 0 : index
    %68 = vector.load %arg8[%c1_40, %c0_41] : memref<48x128xf32, #tpu.memory_space<vmem>>, vector<16x128xf32>
    tpu.vector_store %arg8[%c1_40, %c0_41], %49 {strides = array<i32>} : memref<48x128xf32, #tpu.memory_space<vmem>>, vector<16x128xf32>,
    %69 = vector.extract_strided_slice %49 {offsets = [1, 0], sizes = [1, 128], strides = [1, 1]} : vector<16x128xf32> to vector<1x128xf32>
    %c0_42 = arith.constant 0 : index
    %c0_43 = arith.constant 0 : index
    %70 = vector.load %arg8[%c0_42, %c0_43] : memref<48x128xf32, #tpu.memory_space<vmem>>, vector<1x128xf32>
    tpu.vector_store %arg8[%c0_42, %c0_43], %69 {strides = array<i32>} : memref<48x128xf32, #tpu.memory_space<vmem>>, vector<1x128xf32>,
    %71 = vector.extract_strided_slice %49 {offsets = [14, 0], sizes = [1, 128], strides = [1, 1]} : vector<16x128xf32> to vector<1x128xf32>
    %c17_44 = arith.constant 17 : index
    %c0_45 = arith.constant 0 : index
    %72 = vector.load %arg8[%c17_44, %c0_45] : memref<48x128xf32, #tpu.memory_space<vmem>>, vector<1x128xf32>
    tpu.vector_store %arg8[%c17_44, %c0_45], %71 {strides = array<i32>} : memref<48x128xf32, #tpu.memory_space<vmem>>, vector<1x128xf32>,
    %cst_46 = arith.constant 0.000000e+00 : f32
    %73 = vector.broadcast %cst_46 : f32 to vector<6x128xf32>
    %c18_47 = arith.constant 18 : index
    %c0_48 = arith.constant 0 : index
    %74 = vector.load %arg8[%c18_47, %c0_48] : memref<48x128xf32, #tpu.memory_space<vmem>>, vector<6x128xf32>
    tpu.vector_store %arg8[%c18_47, %c0_48], %73 {strides = array<i32>} : memref<48x128xf32, #tpu.memory_space<vmem>>, vector<6x128xf32>,
    %c25_49 = arith.constant 25 : index
    %c0_50 = arith.constant 0 : index
    %75 = vector.load %arg8[%c25_49, %c0_50] : memref<48x128xf32, #tpu.memory_space<vmem>>, vector<16x128xf32>
    tpu.vector_store %arg8[%c25_49, %c0_50], %67 {strides = array<i32>} : memref<48x128xf32, #tpu.memory_space<vmem>>, vector<16x128xf32>,
    %76 = vector.extract_strided_slice %67 {offsets = [1, 0], sizes = [1, 128], strides = [1, 1]} : vector<16x128xf32> to vector<1x128xf32>
    %c24_51 = arith.constant 24 : index
    %c0_52 = arith.constant 0 : index
    %77 = vector.load %arg8[%c24_51, %c0_52] : memref<48x128xf32, #tpu.memory_space<vmem>>, vector<1x128xf32>
    tpu.vector_store %arg8[%c24_51, %c0_52], %76 {strides = array<i32>} : memref<48x128xf32, #tpu.memory_space<vmem>>, vector<1x128xf32>,
    %78 = vector.extract_strided_slice %67 {offsets = [14, 0], sizes = [1, 128], strides = [1, 1]} : vector<16x128xf32> to vector<1x128xf32>
    %c41_53 = arith.constant 41 : index
    %c0_54 = arith.constant 0 : index
    %79 = vector.load %arg8[%c41_53, %c0_54] : memref<48x128xf32, #tpu.memory_space<vmem>>, vector<1x128xf32>
    tpu.vector_store %arg8[%c41_53, %c0_54], %78 {strides = array<i32>} : memref<48x128xf32, #tpu.memory_space<vmem>>, vector<1x128xf32>,
    %cst_55 = arith.constant 0.000000e+00 : f32
    %80 = vector.broadcast %cst_55 : f32 to vector<6x128xf32>
    %c42_56 = arith.constant 42 : index
    %c0_57 = arith.constant 0 : index
    %81 = vector.load %arg8[%c42_56, %c0_57] : memref<48x128xf32, #tpu.memory_space<vmem>>, vector<6x128xf32>
    tpu.vector_store %arg8[%c42_56, %c0_57], %80 {strides = array<i32>} : memref<48x128xf32, #tpu.memory_space<vmem>>, vector<6x128xf32>,
    %c0_58 = arith.constant 0 : index
    %c0_59 = arith.constant 0 : index
    %82 = vector.load %arg8[%c0_58, %c0_59] : memref<48x128xf32, #tpu.memory_space<vmem>>, vector<48x128xf32>
    %83 = arith.truncf %82 : vector<48x128xf32> to vector<48x128xbf16>
    %c0_60 = arith.constant 0 : index
    %c0_61 = arith.constant 0 : index
    %c0_62 = arith.constant 0 : index
    %84 = vector.load %arg4[%c0_60, %c0_61, %c0_62] : memref<3x128x128xbf16, #tpu.memory_space<vmem>>, vector<1x128x128xbf16>
    %85 = vector.shape_cast %84 : vector<1x128x128xbf16> to vector<128x128xbf16>
    %cst_63 = arith.constant dense<0.000000e+00> : vector<48x128xf32>
    %86 = tpu.matmul %83, %85, %cst_63 {dimension_numbers = #tpu.dot_dimension_numbers<[1], [0], [0], [1], [0, 0, 1, 1], [], []>} : vector<48x128xbf16>, vector<128x128xbf16>, vector<48x128xf32> -> vector<48x128xf32>
    %c1_64 = arith.constant 1 : index
    %c0_65 = arith.constant 0 : index
    %c0_66 = arith.constant 0 : index
    %87 = vector.load %arg4[%c1_64, %c0_65, %c0_66] : memref<3x128x128xbf16, #tpu.memory_space<vmem>>, vector<1x128x128xbf16>
    %88 = vector.shape_cast %87 : vector<1x128x128xbf16> to vector<128x128xbf16>
    %cst_67 = arith.constant dense<0.000000e+00> : vector<48x128xf32>
    %89 = tpu.matmul %83, %88, %cst_67 {dimension_numbers = #tpu.dot_dimension_numbers<[1], [0], [0], [1], [0, 0, 1, 1], [], []>} : vector<48x128xbf16>, vector<128x128xbf16>, vector<48x128xf32> -> vector<48x128xf32>
    %c2_68 = arith.constant 2 : index
    %c0_69 = arith.constant 0 : index
    %c0_70 = arith.constant 0 : index
    %90 = vector.load %arg4[%c2_68, %c0_69, %c0_70] : memref<3x128x128xbf16, #tpu.memory_space<vmem>>, vector<1x128x128xbf16>
    %91 = vector.shape_cast %90 : vector<1x128x128xbf16> to vector<128x128xbf16>
    %cst_71 = arith.constant dense<0.000000e+00> : vector<48x128xf32>
    %92 = tpu.matmul %83, %91, %cst_71 {dimension_numbers = #tpu.dot_dimension_numbers<[1], [0], [0], [1], [0, 0, 1, 1], [], []>} : vector<48x128xbf16>, vector<128x128xbf16>, vector<48x128xf32> -> vector<48x128xf32>
    %c0_72 = arith.constant 0 : index
    %c0_73 = arith.constant 0 : index
    %93 = vector.load %arg5[%c0_72, %c0_73] : memref<1x128xf32, #tpu.memory_space<vmem>>, vector<1x128xf32>
    %94 = vector.shape_cast %93 : vector<1x128xf32> to vector<1x128xf32>
    %95 = vector.broadcast %94 : vector<1x128xf32> to vector<16x128xf32>
    %96 = vector.extract_strided_slice %86 {offsets = [0, 0], sizes = [16, 128], strides = [1, 1]} : vector<48x128xf32> to vector<16x128xf32>
    %97 = vector.extract_strided_slice %89 {offsets = [1, 0], sizes = [16, 128], strides = [1, 1]} : vector<48x128xf32> to vector<16x128xf32>
    %98 = arith.addf %96, %97 : vector<16x128xf32>
    %99 = vector.extract_strided_slice %92 {offsets = [2, 0], sizes = [16, 128], strides = [1, 1]} : vector<48x128xf32> to vector<16x128xf32>
    %100 = arith.addf %98, %99 : vector<16x128xf32>
    %101 = arith.addf %100, %95 : vector<16x128xf32>
    %cst_74 = arith.constant 0.000000e+00 : f32
    %102 = vector.broadcast %cst_74 : f32 to vector<16x128xf32>
    %103 = arith.cmpf ogt, %101, %102 : vector<16x128xf32>
    %cst_75 = arith.constant 0.000000e+00 : f32
    %104 = vector.broadcast %cst_75 : f32 to vector<16x128xf32>
    %105 = arith.minimumf %101, %104 : vector<16x128xf32>
    %106 = math.exp %105 : vector<16x128xf32>
    %cst_76 = arith.constant 1.000000e+00 : f32
    %107 = vector.broadcast %cst_76 : f32 to vector<16x128xf32>
    %108 = arith.subf %106, %107 : vector<16x128xf32>
    %cst_77 = arith.constant 1.67326319 : f32
    %109 = vector.broadcast %cst_77 : f32 to vector<16x128xf32>
    %110 = arith.mulf %109, %108 : vector<16x128xf32>
    %111 = arith.select %103, %101, %110 : vector<16x128xi1>, vector<16x128xf32>
    %cst_78 = arith.constant 1.05070102 : f32
    %112 = vector.broadcast %cst_78 : f32 to vector<16x128xf32>
    %113 = arith.mulf %112, %111 : vector<16x128xf32>
    %114 = vector.extract_strided_slice %86 {offsets = [24, 0], sizes = [16, 128], strides = [1, 1]} : vector<48x128xf32> to vector<16x128xf32>
    %115 = vector.extract_strided_slice %89 {offsets = [25, 0], sizes = [16, 128], strides = [1, 1]} : vector<48x128xf32> to vector<16x128xf32>
    %116 = arith.addf %114, %115 : vector<16x128xf32>
    %117 = vector.extract_strided_slice %92 {offsets = [26, 0], sizes = [16, 128], strides = [1, 1]} : vector<48x128xf32> to vector<16x128xf32>
    %118 = arith.addf %116, %117 : vector<16x128xf32>
    %119 = arith.addf %118, %95 : vector<16x128xf32>
    %cst_79 = arith.constant 0.000000e+00 : f32
    %120 = vector.broadcast %cst_79 : f32 to vector<16x128xf32>
    %121 = arith.cmpf ogt, %119, %120 : vector<16x128xf32>
    %cst_80 = arith.constant 0.000000e+00 : f32
    %122 = vector.broadcast %cst_80 : f32 to vector<16x128xf32>
    %123 = arith.minimumf %119, %122 : vector<16x128xf32>
    %124 = math.exp %123 : vector<16x128xf32>
    %cst_81 = arith.constant 1.000000e+00 : f32
    %125 = vector.broadcast %cst_81 : f32 to vector<16x128xf32>
    %126 = arith.subf %124, %125 : vector<16x128xf32>
    %cst_82 = arith.constant 1.67326319 : f32
    %127 = vector.broadcast %cst_82 : f32 to vector<16x128xf32>
    %128 = arith.mulf %127, %126 : vector<16x128xf32>
    %129 = arith.select %121, %119, %128 : vector<16x128xi1>, vector<16x128xf32>
    %cst_83 = arith.constant 1.05070102 : f32
    %130 = vector.broadcast %cst_83 : f32 to vector<16x128xf32>
    %131 = arith.mulf %130, %129 : vector<16x128xf32>
    %c0_84 = arith.constant 0 : index
    %c0_85 = arith.constant 0 : index
    %c0_86 = arith.constant 0 : index
    %132 = vector.load %arg6[%c0_84, %c0_85, %c0_86] : memref<2x16x128xf32, #tpu.memory_space<vmem>>, vector<1x16x128xf32>
    %133 = vector.shape_cast %132 : vector<1x16x128xf32> to vector<16x128xf32>
    %134 = vector.shape_cast %113 : vector<16x128xf32> to vector<1x16x128xf32>
    tpu.vector_store %arg6[%c0_84, %c0_85, %c0_86], %134 {strides = array<i32>} : memref<2x16x128xf32, #tpu.memory_space<vmem>>, vector<1x16x128xf32>,
    %c1_87 = arith.constant 1 : index
    %c0_88 = arith.constant 0 : index
    %c0_89 = arith.constant 0 : index
    %135 = vector.load %arg6[%c1_87, %c0_88, %c0_89] : memref<2x16x128xf32, #tpu.memory_space<vmem>>, vector<1x16x128xf32>
    %136 = vector.shape_cast %135 : vector<1x16x128xf32> to vector<16x128xf32>
    %137 = vector.shape_cast %131 : vector<16x128xf32> to vector<1x16x128xf32>
    tpu.vector_store %arg6[%c1_87, %c0_88, %c0_89], %137 {strides = array<i32>} : memref<2x16x128xf32, #tpu.memory_space<vmem>>, vector<1x16x128xf32>,
    return
  }
  func.func @transform_0(%arg0: i32) -> (i32, i32, i32) {
    %c0_i32 = arith.constant 0 : i32
    %c0_i32_0 = arith.constant 0 : i32
    %c0_i32_1 = arith.constant 0 : i32
    return %arg0, %c0_i32, %c0_i32_0 : i32, i32, i32
  }
  func.func @transform_1(%arg0: i32) -> (i32, i32, i32) {
    %c0_i32 = arith.constant 0 : i32
    %c0_i32_0 = arith.constant 0 : i32
    %c0_i32_1 = arith.constant 0 : i32
    %c0_i32_2 = arith.constant 0 : i32
    return %c0_i32, %c0_i32_0, %c0_i32_1 : i32, i32, i32
  }
  func.func @transform_2(%arg0: i32) -> (i32, i32) {
    %c0_i32 = arith.constant 0 : i32
    %c0_i32_0 = arith.constant 0 : i32
    %c0_i32_1 = arith.constant 0 : i32
    return %c0_i32, %c0_i32_0 : i32, i32
  }
  func.func @transform_3(%arg0: i32) -> (i32, i32, i32) {
    %c0_i32 = arith.constant 0 : i32
    %c0_i32_0 = arith.constant 0 : i32
    %c0_i32_1 = arith.constant 0 : i32
    %c0_i32_2 = arith.constant 0 : i32
    return %c0_i32, %c0_i32_0, %c0_i32_1 : i32, i32, i32
  }
  func.func @transform_4(%arg0: i32) -> (i32, i32) {
    %c0_i32 = arith.constant 0 : i32
    %c0_i32_0 = arith.constant 0 : i32
    %c0_i32_1 = arith.constant 0 : i32
    return %c0_i32, %c0_i32_0 : i32, i32
  }
  func.func @transform_5(%arg0: i32) -> (i32, i32, i32) {
    %c0_i32 = arith.constant 0 : i32
    %c0_i32_0 = arith.constant 0 : i32
    %c0_i32_1 = arith.constant 0 : i32
    return %arg0, %c0_i32, %c0_i32_0 : i32, i32, i32
  }
}

</mosaic_0001>

<llo_original>
// kernel: unet_conv2_forward.1
$region0: #{unet_conv2_forward.1}
  #allocation0 [shape = 'u32[]', space=smem, size = 0x4, offset = 0x4, fixed_abs, tag = 'smem constant byte address 0x4 - core index']
  #allocation1 [shape = 'u32[144,128]{1,0:T(1,128)}', space=vmem, size = 0x12000, scoped, tag = 'internal scratch']
  #allocation2 [shape = 'f32[48,64]{1,0:T(8,128)}', space=vmem, size = 0x6000, scoped, tag = 'scratch operand']
  #allocation3 [shape = 'f32[48,128]{1,0:T(8,128)}', space=vmem, size = 0x6000, scoped, tag = 'scratch operand']
  %s0 = inlined_call_operand.vmem [shape: f32[2,16,64], index: 0, kind: input, shape index: {}]
  %s1 = inlined_call_operand.vmem [shape: bf16[3,64,128], index: 1, kind: input, shape index: {}]
  %s2 = inlined_call_operand.vmem [shape: f32[1,128], index: 2, kind: input, shape index: {}]
  %s3 = inlined_call_operand.vmem [shape: bf16[3,128,128], index: 3, kind: input, shape index: {}]
  %s4 = inlined_call_operand.vmem [shape: f32[1,128], index: 4, kind: input, shape index: {}]
  %s5 = inlined_call_operand.vmem [shape: f32[2,16,128], index: 5, kind: output, shape index: {}]
  %s6 = sld [smem:[#allocation0]]
  $region30: #{unet_conv2_forward.1} parent=0
    _
  %s8 = ssub.s32 1, %s6
  %s9 = scalar_select 0, %s8, %s6
  // Predicated region
  $region2: #{unet_conv2_forward.1} parent=0 // pred_check
    _
  $region3: #{unet_conv2_forward.1} parent=0 // pred_check_branch
    %11 = sbr.rel (0) target = $region5
  $region4: #{unet_conv2_forward.1} parent=0 // pred_region
    _
  $region5: #{unet_conv2_forward.1} parent=0 // pred_fallthru
    _
  // Predicated region
  $region6: #{unet_conv2_forward.1} parent=0 // pred_check
    _
  $region7: #{unet_conv2_forward.1} parent=0 // pred_check_branch
    %13 = sbr.rel (0) target = $region9
  $region8: #{unet_conv2_forward.1} parent=0 // pred_region
    _
  $region9: #{unet_conv2_forward.1} parent=0 // pred_fallthru
    _
  // Predicated region
  $region10: #{unet_conv2_forward.1} parent=0 // pred_check
    _
  $region11: #{unet_conv2_forward.1} parent=0 // pred_check_branch
    %15 = sbr.rel (0) target = $region13
  $region12: #{unet_conv2_forward.1} parent=0 // pred_region
    _
  $region13: #{unet_conv2_forward.1} parent=0 // pred_fallthru
    _
  // Predicated region
  $region14: #{unet_conv2_forward.1} parent=0 // pred_check
    _
  $region15: #{unet_conv2_forward.1} parent=0 // pred_check_branch
    %17 = sbr.rel (0) target = $region17
  $region16: #{unet_conv2_forward.1} parent=0 // pred_region
    _
  $region17: #{unet_conv2_forward.1} parent=0 // pred_fallthru
    _
  // Predicated region
  $region18: #{unet_conv2_forward.1} parent=0 // pred_check
    _
  $region19: #{unet_conv2_forward.1} parent=0 // pred_check_branch
    %19 = sbr.rel (0) target = $region21
  $region20: #{unet_conv2_forward.1} parent=0 // pred_region
    _
  $region21: #{unet_conv2_forward.1} parent=0 // pred_fallthru
    _
  %v21 = vld [vmem:[%s0] sm:$0xff]
  %v22 = vld [vmem:[%s0 + $0x8] sm:$0xff]
  %vm23 = vcmask 523264
  %24 = vst.msk [vmem:[#allocation2 + $0x1] sm:$0xff] %vm23, %v21
  %25 = vst.msk [vmem:[#allocation2 + $0x9] sm:$0xff] %vm23, %v22
  %vm26 = vcmask 517121
  %27 = vst.msk [vmem:[#allocation2 - $0x1] sm:$0x2] %vm26, %v21
  %vm28 = vcmask 522246
  %29 = vst.msk [vmem:[#allocation2 + $0xb] sm:$0x40] %vm28, %v22
  %vm30 = vcmask 521216
  %31 = vst.msk [vmem:[#allocation2 + $0x12] sm:$0x3f] %vm30, 0.0
  %s32 = scalar_lea.vmem %s0, 16
  %v33 = vld [vmem:[%s32] sm:$0xff]
  %v34 = vld [vmem:[%s32 + $0x8] sm:$0xff]
  %35 = vst.msk [vmem:[#allocation2 + $0x19] sm:$0xff] %vm23, %v33
  %36 = vst.msk [vmem:[#allocation2 + $0x21] sm:$0xff] %vm23, %v34
  %37 = vst.msk [vmem:[#allocation2 + $0x17] sm:$0x2] %vm26, %v33
  %38 = vst.msk [vmem:[#allocation2 + $0x23] sm:$0x40] %vm28, %v34
  %39 = vst.msk [vmem:[#allocation2 + $0x2a] sm:$0x3f] %vm30, 0.0
  %v40 = vld [vmem:[#allocation2] sm:$0xff]
  %v41 = vld [vmem:[#allocation2 + $0x8] sm:$0xff]
  %v42 = vld [vmem:[#allocation2 + $0x10] sm:$0xff]
  %v43 = vld [vmem:[#allocation2 + $0x18] sm:$0xff]
  %v44 = vld [vmem:[#allocation2 + $0x20] sm:$0xff]
  %v45 = vld [vmem:[#allocation2 + $0x28] sm:$0xff]
  %v46 = vpack.c.bf16 %v41, %v40
  %v47 = vpack.c.bf16 %v43, %v42
  %v48 = vpack.c.bf16 %v45, %v44
  %v49 = vld [vmem:[%s1] sm:$0xf]
  %v50 = vld [vmem:[%s1 + $0x4] sm:$0xf]
  %v51 = vld [vmem:[%s1 + $0x8] sm:$0xf]
  %v52 = vld [vmem:[%s1 + $0xc] sm:$0xf]
  %v53 = vld [vmem:[%s1 + $0x10] sm:$0xf]
  %v54 = vld [vmem:[%s1 + $0x14] sm:$0xf]
  %v55 = vld [vmem:[%s1 + $0x18] sm:$0xf]
  %v56 = vld [vmem:[%s1 + $0x1c] sm:$0xf]
  %v65 = vunpack.c.l.b16 %v49
  %v66 = vunpack.c.l.b16 %v50
  %v67 = vunpack.c.l.b16 %v51
  %v68 = vunpack.c.l.b16 %v52
  %v69 = vunpack.c.l.b16 %v53
  %v70 = vunpack.c.l.b16 %v54
  %v71 = vunpack.c.l.b16 %v55
  %v72 = vunpack.c.l.b16 %v56
  %v73 = vpack.c.b16 %v66, %v65
  %v74 = vpack.c.b16 %v68, %v67
  %v75 = vpack.c.b16 %v70, %v69
  %v76 = vpack.c.b16 %v72, %v71
  %v82 = vsel %vm23, %v46, 0
  %v85 = vsel %vm23, %v47, 0
  %v88 = vsel %vm23, %v48, 0
  %90 = vmatprep.subr.bf16.mxu0 0
  %91 = vmatpush1.bf16.msra.mxu0 %v73
  %92 = vmatprep.subr.bf16.mxu0 0
  %93 = vmatpush1.bf16.msra.mxu0 %v74
  %94 = vmatprep.subr.bf16.mxu0 0
  %95 = vmatpush1.bf16.msra.mxu0 %v75
  %96 = vmatprep.subr.bf16.mxu0 0
  %97 = vmatpush1.bf16.msra.mxu0 %v76
  %98 = vmatprep.subr.bf16.mxu0 0
  %99 = vmatpush1.bf16.msra.mxu0 0
  %100 = vmatprep.subr.bf16.mxu0 0
  %101 = vmatpush1.bf16.msra.mxu0 0
  %102 = vmatprep.subr.bf16.mxu0 0
  %103 = vmatpush1.bf16.msra.mxu0 0
  %104 = vmatprep.subr.bf16.mxu0 0
  %105 = vmatpush1.bf16.msra.mxu0 0
  %106 = vmatprep.subr.bf16.mxu0 0
  %107 = vmatpush1.bf16.msra.mxu0 0
  %108 = vmatprep.subr.bf16.mxu0 0
  %109 = vmatpush1.bf16.msra.mxu0 0
  %110 = vmatprep.subr.bf16.mxu0 0
  %111 = vmatpush1.bf16.msra.mxu0 0
  %112 = vmatprep.subr.bf16.mxu0 0
  %113 = vmatpush1.bf16.msra.mxu0 0
  %114 = vmatprep.subr.bf16.mxu0 0
  %115 = vmatpush1.bf16.msra.mxu0 0
  %116 = vmatprep.subr.bf16.mxu0 0
  %117 = vmatpush1.bf16.msra.mxu0 0
  %118 = vmatprep.subr.bf16.mxu0 0
  %119 = vmatpush1.bf16.msra.mxu0 0
  %120 = vmatprep.subr.bf16.mxu0 0
  %121 = vmatpush1.bf16.msra.mxu0 0
  %122 = vmatprep.mubr.bf16.mxu0 0
  %123 = vmatmul.mubr.bf16.gmra.mrb[0].mxu0 %v82
  %v124 = vpop.f32.mrb[0].mxu0
  %v125 = vadd.f32 0.0, %v124
  %v126 = vpop.f32.mrb[0].mxu0
  %v127 = vpop.f32.mrb[0].mxu0
  %v128 = vadd.f32 0.0, %v127
  %v129 = vpop.f32.mrb[0].mxu0
  %130 = vmatprep.mubr.bf16.mxu0 0
  %131 = vmatmul.mubr.bf16.gmra.mrb[0].mxu0 %v85
  %v132 = vpop.f32.mrb[0].mxu0
  %v133 = vpop.f32.mrb[0].mxu0
  %v134 = vpop.f32.mrb[0].mxu0
  %v135 = vadd.f32 0.0, %v134
  %v136 = vpop.f32.mrb[0].mxu0
  %137 = vmatprep.mubr.bf16.mxu0 0
  %138 = vmatmul.mubr.bf16.gmra.mrb[0].mxu0 %v88
  %v139 = vpop.f32.mrb[0].mxu0
  %v140 = vadd.f32 0.0, %v139
  %v141 = vpop.f32.mrb[0].mxu0
  %v142 = vpop.f32.mrb[0].mxu0
  %v143 = vpop.f32.mrb[0].mxu0
  %144 = vdwg.mxu0
  %s145 = scalar_lea.vmem %s1, 32
  %v146 = vld [vmem:[%s145] sm:$0xf]
  %v147 = vld [vmem:[%s145 + $0x4] sm:$0xf]
  %v148 = vld [vmem:[%s145 + $0x8] sm:$0xf]
  %v149 = vld [vmem:[%s145 + $0xc] sm:$0xf]
  %v150 = vld [vmem:[%s145 + $0x10] sm:$0xf]
  %v151 = vld [vmem:[%s145 + $0x14] sm:$0xf]
  %v152 = vld [vmem:[%s145 + $0x18] sm:$0xf]
  %v153 = vld [vmem:[%s145 + $0x1c] sm:$0xf]
  %v162 = vunpack.c.l.b16 %v146
  %v163 = vunpack.c.l.b16 %v147
  %v164 = vunpack.c.l.b16 %v148
  %v165 = vunpack.c.l.b16 %v149
  %v166 = vunpack.c.l.b16 %v150
  %v167 = vunpack.c.l.b16 %v151
  %v168 = vunpack.c.l.b16 %v152
  %v169 = vunpack.c.l.b16 %v153
  %v170 = vpack.c.b16 %v163, %v162
  %v171 = vpack.c.b16 %v165, %v164
  %v172 = vpack.c.b16 %v167, %v166
  %v173 = vpack.c.b16 %v169, %v168
  %178 = vmatprep.subr.bf16.mxu0 0
  %179 = vmatpush1.bf16.msra.mxu0 %v170
  %180 = vmatprep.subr.bf16.mxu0 0
  %181 = vmatpush1.bf16.msra.mxu0 %v171
  %182 = vmatprep.subr.bf16.mxu0 0
  %183 = vmatpush1.bf16.msra.mxu0 %v172
  %184 = vmatprep.subr.bf16.mxu0 0
  %185 = vmatpush1.bf16.msra.mxu0 %v173
  %186 = vmatprep.subr.bf16.mxu0 0
  %187 = vmatpush1.bf16.msra.mxu0 0
  %188 = vmatprep.subr.bf16.mxu0 0
  %189 = vmatpush1.bf16.msra.mxu0 0
  %190 = vmatprep.subr.bf16.mxu0 0
  %191 = vmatpush1.bf16.msra.mxu0 0
  %192 = vmatprep.subr.bf16.mxu0 0
  %193 = vmatpush1.bf16.msra.mxu0 0
  %194 = vmatprep.subr.bf16.mxu0 0
  %195 = vmatpush1.bf16.msra.mxu0 0
  %196 = vmatprep.subr.bf16.mxu0 0
  %197 = vmatpush1.bf16.msra.mxu0 0
  %198 = vmatprep.subr.bf16.mxu0 0
  %199 = vmatpush1.bf16.msra.mxu0 0
  %200 = vmatprep.subr.bf16.mxu0 0
  %201 = vmatpush1.bf16.msra.mxu0 0
  %202 = vmatprep.subr.bf16.mxu0 0
  %203 = vmatpush1.bf16.msra.mxu0 0
  %204 = vmatprep.subr.bf16.mxu0 0
  %205 = vmatpush1.bf16.msra.mxu0 0
  %206 = vmatprep.subr.bf16.mxu0 0
  %207 = vmatpush1.bf16.msra.mxu0 0
  %208 = vmatprep.subr.bf16.mxu0 0
  %209 = vmatpush1.bf16.msra.mxu0 0
  %210 = vmatprep.mubr.bf16.mxu0 0
  %211 = vmatmul.mubr.bf16.gmra.mrb[0].mxu0 %v82
  %v212 = vpop.f32.mrb[0].mxu0
  %v213 = vadd.f32 0.0, %v212
  %v214 = vpop.f32.mrb[0].mxu0
  %v215 = vpop.f32.mrb[0].mxu0
  %v216 = vadd.f32 0.0, %v215
  %v217 = vpop.f32.mrb[0].mxu0
  %218 = vmatprep.mubr.bf16.mxu0 0
  %219 = vmatmul.mubr.bf16.gmra.mrb[0].mxu0 %v85
  %v220 = vpop.f32.mrb[0].mxu0
  %v221 = vadd.f32 0.0, %v220
  %v222 = vpop.f32.mrb[0].mxu0
  %v223 = vpop.f32.mrb[0].mxu0
  %v224 = vadd.f32 0.0, %v223
  %v225 = vpop.f32.mrb[0].mxu0
  %226 = vmatprep.mubr.bf16.mxu0 0
  %227 = vmatmul.mubr.bf16.gmra.mrb[0].mxu0 %v88
  %v228 = vpop.f32.mrb[0].mxu0
  %v229 = vadd.f32 0.0, %v228
  %v230 = vpop.f32.mrb[0].mxu0
  %v231 = vpop.f32.mrb[0].mxu0
  %v232 = vadd.f32 0.0, %v231
  %v233 = vpop.f32.mrb[0].mxu0
  %234 = vdwg.mxu0
  %s235 = scalar_lea.vmem %s1, 64
  %v236 = vld [vmem:[%s235] sm:$0xf]
  %v237 = vld [vmem:[%s235 + $0x4] sm:$0xf]
  %v238 = vld [vmem:[%s235 + $0x8] sm:$0xf]
  %v239 = vld [vmem:[%s235 + $0xc] sm:$0xf]
  %v240 = vld [vmem:[%s235 + $0x10] sm:$0xf]
  %v241 = vld [vmem:[%s235 + $0x14] sm:$0xf]
  %v242 = vld [vmem:[%s235 + $0x18] sm:$0xf]
  %v243 = vld [vmem:[%s235 + $0x1c] sm:$0xf]
  %v252 = vunpack.c.l.b16 %v236
  %v253 = vunpack.c.l.b16 %v237
  %v254 = vunpack.c.l.b16 %v238
  %v255 = vunpack.c.l.b16 %v239
  %v256 = vunpack.c.l.b16 %v240
  %v257 = vunpack.c.l.b16 %v241
  %v258 = vunpack.c.l.b16 %v242
  %v259 = vunpack.c.l.b16 %v243
  %v260 = vpack.c.b16 %v253, %v252
  %v261 = vpack.c.b16 %v255, %v254
  %v262 = vpack.c.b16 %v257, %v256
  %v263 = vpack.c.b16 %v259, %v258
  %268 = vmatprep.subr.bf16.mxu0 0
  %269 = vmatpush1.bf16.msra.mxu0 %v260
  %270 = vmatprep.subr.bf16.mxu0 0
  %271 = vmatpush1.bf16.msra.mxu0 %v261
  %272 = vmatprep.subr.bf16.mxu0 0
  %273 = vmatpush1.bf16.msra.mxu0 %v262
  %274 = vmatprep.subr.bf16.mxu0 0
  %275 = vmatpush1.bf16.msra.mxu0 %v263
  %276 = vmatprep.subr.bf16.mxu0 0
  %277 = vmatpush1.bf16.msra.mxu0 0
  %278 = vmatprep.subr.bf16.mxu0 0
  %279 = vmatpush1.bf16.msra.mxu0 0
  %280 = vmatprep.subr.bf16.mxu0 0
  %281 = vmatpush1.bf16.msra.mxu0 0
  %282 = vmatprep.subr.bf16.mxu0 0
  %283 = vmatpush1.bf16.msra.mxu0 0
  %284 = vmatprep.subr.bf16.mxu0 0
  %285 = vmatpush1.bf16.msra.mxu0 0
  %286 = vmatprep.subr.bf16.mxu0 0
  %287 = vmatpush1.bf16.msra.mxu0 0
  %288 = vmatprep.subr.bf16.mxu0 0
  %289 = vmatpush1.bf16.msra.mxu0 0
  %290 = vmatprep.subr.bf16.mxu0 0
  %291 = vmatpush1.bf16.msra.mxu0 0
  %292 = vmatprep.subr.bf16.mxu0 0
  %293 = vmatpush1.bf16.msra.mxu0 0
  %294 = vmatprep.subr.bf16.mxu0 0
  %295 = vmatpush1.bf16.msra.mxu0 0
  %296 = vmatprep.subr.bf16.mxu0 0
  %297 = vmatpush1.bf16.msra.mxu0 0
  %298 = vmatprep.subr.bf16.mxu0 0
  %299 = vmatpush1.bf16.msra.mxu0 0
  %300 = vmatprep.mubr.bf16.mxu0 0
  %301 = vmatmul.mubr.bf16.gmra.mrb[0].mxu0 %v82
  %v302 = vpop.f32.mrb[0].mxu0
  %v303 = vadd.f32 0.0, %v302
  %v304 = vpop.f32.mrb[0].mxu0
  %v305 = vpop.f32.mrb[0].mxu0
  %v306 = vadd.f32 0.0, %v305
  %v307 = vpop.f32.mrb[0].mxu0
  %308 = vmatprep.mubr.bf16.mxu0 0
  %309 = vmatmul.mubr.bf16.gmra.mrb[0].mxu0 %v85
  %v310 = vpop.f32.mrb[0].mxu0
  %v311 = vadd.f32 0.0, %v310
  %v312 = vpop.f32.mrb[0].mxu0
  %v313 = vpop.f32.mrb[0].mxu0
  %v314 = vadd.f32 0.0, %v313
  %v315 = vpop.f32.mrb[0].mxu0
  %316 = vmatprep.mubr.bf16.mxu0 0
  %317 = vmatmul.mubr.bf16.gmra.mrb[0].mxu0 %v88
  %v318 = vpop.f32.mrb[0].mxu0
  %v319 = vadd.f32 0.0, %v318
  %v320 = vpop.f32.mrb[0].mxu0
  %v321 = vpop.f32.mrb[0].mxu0
  %v322 = vadd.f32 0.0, %v321
  %v323 = vpop.f32.mrb[0].mxu0
  %324 = vdwg.mxu0
  %v325 = vld [vmem:[%s2] sm:$0x1]
  %v327 = vlaneseq
  %v328 = vshrl.u32 %v327, 7
  %v329 = vsub.s32 0, %v328
  %v330 = vrot.slane %v325, %v329
  %vm335 = vcmask 1046528
  %v336 = vrot.slane %v213, 1
  %v337 = vrot.slane %v216, 1
  %v338 = vsel %vm335, %v336, %v337
  %v339 = vrot.slane %v221, 1
  %v340 = vsel %vm335, %v337, %v339
  %v343 = vadd.f32 %v125, %v338
  %v344 = vadd.f32 %v128, %v340
  %vm348 = vcmask 1045504
  %v349 = vrot.slane %v303, 2
  %v350 = vrot.slane %v306, 2
  %v351 = vsel %vm348, %v349, %v350
  %v352 = vrot.slane %v311, 2
  %v353 = vsel %vm348, %v350, %v352
  %v356 = vadd.f32 %v343, %v351
  %v357 = vadd.f32 %v344, %v353
  %v358 = vadd.f32 %v356, %v330
  %v359 = vadd.f32 %v357, %v330
  %vm360 = vcmp.gt.f32.partialorder %v358, 0.0
  %vm361 = vcmp.gt.f32.partialorder %v359, 0.0
  %v362 = vmin.f32 %v358, 0.0
  %v363 = vmin.f32 %v359, 0.0
  %v364 = vmul.f32 %v362, 1.442695
  %v365 = vpow.pop %v364
  %v366 = vmul.f32 %v363, 1.442695
  %v367 = vpow.pop %v366
  %v368 = vsub.f32 %v365, 1.0
  %v369 = vsub.f32 %v367, 1.0
  %v370 = vmul.f32 %v368, 1.6732632
  %v371 = vmul.f32 %v369, 1.6732632
  %v372 = vsel %vm360, %v358, %v370
  %v373 = vsel %vm361, %v359, %v371
  %v374 = vmul.f32 %v372, 1.050701
  %v375 = vmul.f32 %v373, 1.050701
  %v379 = vrot.slane %v224, 1
  %v380 = vrot.slane %v229, 1
  %v381 = vsel %vm335, %v379, %v380
  %v382 = vrot.slane %v232, 1
  %v383 = vsel %vm335, %v380, %v382
  %v386 = vadd.f32 %v135, %v381
  %v387 = vadd.f32 %v140, %v383
  %v391 = vrot.slane %v314, 2
  %v392 = vrot.slane %v319, 2
  %v393 = vsel %vm348, %v391, %v392
  %v394 = vrot.slane %v322, 2
  %v395 = vsel %vm348, %v392, %v394
  %v398 = vadd.f32 %v386, %v393
  %v399 = vadd.f32 %v387, %v395
  %v400 = vadd.f32 %v398, %v330
  %v401 = vadd.f32 %v399, %v330
  %vm402 = vcmp.gt.f32.partialorder %v400, 0.0
  %vm403 = vcmp.gt.f32.partialorder %v401, 0.0
  %v404 = vmin.f32 %v400, 0.0
  %v405 = vmin.f32 %v401, 0.0
  %v406 = vmul.f32 %v404, 1.442695
  %v407 = vpow.pop %v406
  %v408 = vmul.f32 %v405, 1.442695
  %v409 = vpow.pop %v408
  %v410 = vsub.f32 %v407, 1.0
  %v411 = vsub.f32 %v409, 1.0
  %v412 = vmul.f32 %v410, 1.6732632
  %v413 = vmul.f32 %v411, 1.6732632
  %v414 = vsel %vm402, %v400, %v412
  %v415 = vsel %vm403, %v401, %v413
  %v416 = vmul.f32 %v414, 1.050701
  %v417 = vmul.f32 %v415, 1.050701
  %418 = vst [vmem:[#allocation3 + $0x1] sm:$0xff] %v374
  %419 = vst [vmem:[#allocation3 + $0x9] sm:$0xff] %v375
  %420 = vst [vmem:[#allocation3 - $0x1] sm:$0x2] %v374
  %421 = vst [vmem:[#allocation3 + $0xb] sm:$0x40] %v375
  %422 = vst [vmem:[#allocation3 + $0x12] sm:$0x3f] 0.0
  %423 = vst [vmem:[#allocation3 + $0x19] sm:$0xff] %v416
  %424 = vst [vmem:[#allocation3 + $0x21] sm:$0xff] %v417
  %425 = vst [vmem:[#allocation3 + $0x17] sm:$0x2] %v416
  %426 = vst [vmem:[#allocation3 + $0x23] sm:$0x40] %v417
  %427 = vst [vmem:[#allocation3 + $0x2a] sm:$0x3f] 0.0
  %v428 = vld [vmem:[#allocation3] sm:$0xff]
  %v429 = vld [vmem:[#allocation3 + $0x8] sm:$0xff]
  %v430 = vld [vmem:[#allocation3 + $0x10] sm:$0xff]
  %v431 = vld [vmem:[#allocation3 + $0x18] sm:$0xff]
  %v432 = vld [vmem:[#allocation3 + $0x20] sm:$0xff]
  %v433 = vld [vmem:[#allocation3 + $0x28] sm:$0xff]
  %v434 = vpack.c.bf16 %v429, %v428
  %v435 = vpack.c.bf16 %v431, %v430
  %v436 = vpack.c.bf16 %v433, %v432
  %v437 = vld [vmem:[%s3] sm:$0xf]
  %v438 = vld [vmem:[%s3 + $0x4] sm:$0xf]
  %v439 = vld [vmem:[%s3 + $0x8] sm:$0xf]
  %v440 = vld [vmem:[%s3 + $0xc] sm:$0xf]
  %v441 = vld [vmem:[%s3 + $0x10] sm:$0xf]
  %v442 = vld [vmem:[%s3 + $0x14] sm:$0xf]
  %v443 = vld [vmem:[%s3 + $0x18] sm:$0xf]
  %v444 = vld [vmem:[%s3 + $0x1c] sm:$0xf]
  %v445 = vld [vmem:[%s3 + $0x20] sm:$0xf]
  %v446 = vld [vmem:[%s3 + $0x24] sm:$0xf]
  %v447 = vld [vmem:[%s3 + $0x28] sm:$0xf]
  %v448 = vld [vmem:[%s3 + $0x2c] sm:$0xf]
  %v449 = vld [vmem:[%s3 + $0x30] sm:$0xf]
  %v450 = vld [vmem:[%s3 + $0x34] sm:$0xf]
  %v451 = vld [vmem:[%s3 + $0x38] sm:$0xf]
  %v452 = vld [vmem:[%s3 + $0x3c] sm:$0xf]
  %v469 = vunpack.c.l.b16 %v437
  %v470 = vunpack.c.l.b16 %v438
  %v471 = vunpack.c.l.b16 %v439
  %v472 = vunpack.c.l.b16 %v440
  %v473 = vunpack.c.l.b16 %v441
  %v474 = vunpack.c.l.b16 %v442
  %v475 = vunpack.c.l.b16 %v443
  %v476 = vunpack.c.l.b16 %v444
  %v477 = vunpack.c.l.b16 %v445
  %v478 = vunpack.c.l.b16 %v446
  %v479 = vunpack.c.l.b16 %v447
  %v480 = vunpack.c.l.b16 %v448
  %v481 = vunpack.c.l.b16 %v449
  %v482 = vunpack.c.l.b16 %v450
  %v483 = vunpack.c.l.b16 %v451
  %v484 = vunpack.c.l.b16 %v452
  %v485 = vpack.c.b16 %v470, %v469
  %v486 = vpack.c.b16 %v472, %v471
  %v487 = vpack.c.b16 %v474, %v473
  %v488 = vpack.c.b16 %v476, %v475
  %v489 = vpack.c.b16 %v478, %v477
  %v490 = vpack.c.b16 %v480, %v479
  %v491 = vpack.c.b16 %v482, %v481
  %v492 = vpack.c.b16 %v484, %v483
  %501 = vmatprep.subr.bf16.mxu0 0
  %502 = vmatpush1.bf16.msra.mxu0 %v485
  %503 = vmatprep.subr.bf16.mxu0 0
  %504 = vmatpush1.bf16.msra.mxu0 %v486
  %505 = vmatprep.subr.bf16.mxu0 0
  %506 = vmatpush1.bf16.msra.mxu0 %v487
  %507 = vmatprep.subr.bf16.mxu0 0
  %508 = vmatpush1.bf16.msra.mxu0 %v488
  %509 = vmatprep.subr.bf16.mxu0 0
  %510 = vmatpush1.bf16.msra.mxu0 %v489
  %511 = vmatprep.subr.bf16.mxu0 0
  %512 = vmatpush1.bf16.msra.mxu0 %v490
  %513 = vmatprep.subr.bf16.mxu0 0
  %514 = vmatpush1.bf16.msra.mxu0 %v491
  %515 = vmatprep.subr.bf16.mxu0 0
  %516 = vmatpush1.bf16.msra.mxu0 %v492
  %517 = vmatprep.subr.bf16.mxu0 0
  %518 = vmatpush1.bf16.msra.mxu0 0
  %519 = vmatprep.subr.bf16.mxu0 0
  %520 = vmatpush1.bf16.msra.mxu0 0
  %521 = vmatprep.subr.bf16.mxu0 0
  %522 = vmatpush1.bf16.msra.mxu0 0
  %523 = vmatprep.subr.bf16.mxu0 0
  %524 = vmatpush1.bf16.msra.mxu0 0
  %525 = vmatprep.subr.bf16.mxu0 0
  %526 = vmatpush1.bf16.msra.mxu0 0
  %527 = vmatprep.subr.bf16.mxu0 0
  %528 = vmatpush1.bf16.msra.mxu0 0
  %529 = vmatprep.subr.bf16.mxu0 0
  %530 = vmatpush1.bf16.msra.mxu0 0
  %531 = vmatprep.subr.bf16.mxu0 0
  %532 = vmatpush1.bf16.msra.mxu0 0
  %533 = vmatprep.mubr.bf16.mxu0 0
  %534 = vmatmul.mubr.bf16.gmra.mrb[0].mxu0 %v434
  %v535 = vpop.f32.mrb[0].mxu0
  %v536 = vadd.f32 0.0, %v535
  %v537 = vpop.f32.mrb[0].mxu0
  %v538 = vpop.f32.mrb[0].mxu0
  %v539 = vadd.f32 0.0, %v538
  %v540 = vpop.f32.mrb[0].mxu0
  %541 = vmatprep.mubr.bf16.mxu0 0
  %542 = vmatmul.mubr.bf16.gmra.mrb[0].mxu0 %v435
  %v543 = vpop.f32.mrb[0].mxu0
  %v544 = vpop.f32.mrb[0].mxu0
  %v545 = vpop.f32.mrb[0].mxu0
  %v546 = vadd.f32 0.0, %v545
  %v547 = vpop.f32.mrb[0].mxu0
  %548 = vmatprep.mubr.bf16.mxu0 0
  %549 = vmatmul.mubr.bf16.gmra.mrb[0].mxu0 %v436
  %v550 = vpop.f32.mrb[0].mxu0
  %v551 = vadd.f32 0.0, %v550
  %v552 = vpop.f32.mrb[0].mxu0
  %v553 = vpop.f32.mrb[0].mxu0
  %v554 = vpop.f32.mrb[0].mxu0
  %555 = vdwg.mxu0
  %s556 = scalar_lea.vmem %s3, 64
  %v557 = vld [vmem:[%s556] sm:$0xf]
  %v558 = vld [vmem:[%s556 + $0x4] sm:$0xf]
  %v559 = vld [vmem:[%s556 + $0x8] sm:$0xf]
  %v560 = vld [vmem:[%s556 + $0xc] sm:$0xf]
  %v561 = vld [vmem:[%s556 + $0x10] sm:$0xf]
  %v562 = vld [vmem:[%s556 + $0x14] sm:$0xf]
  %v563 = vld [vmem:[%s556 + $0x18] sm:$0xf]
  %v564 = vld [vmem:[%s556 + $0x1c] sm:$0xf]
  %v565 = vld [vmem:[%s556 + $0x20] sm:$0xf]
  %v566 = vld [vmem:[%s556 + $0x24] sm:$0xf]
  %v567 = vld [vmem:[%s556 + $0x28] sm:$0xf]
  %v568 = vld [vmem:[%s556 + $0x2c] sm:$0xf]
  %v569 = vld [vmem:[%s556 + $0x30] sm:$0xf]
  %v570 = vld [vmem:[%s556 + $0x34] sm:$0xf]
  %v571 = vld [vmem:[%s556 + $0x38] sm:$0xf]
  %v572 = vld [vmem:[%s556 + $0x3c] sm:$0xf]
  %v589 = vunpack.c.l.b16 %v557
  %v590 = vunpack.c.l.b16 %v558
  %v591 = vunpack.c.l.b16 %v559
  %v592 = vunpack.c.l.b16 %v560
  %v593 = vunpack.c.l.b16 %v561
  %v594 = vunpack.c.l.b16 %v562
  %v595 = vunpack.c.l.b16 %v563
  %v596 = vunpack.c.l.b16 %v564
  %v597 = vunpack.c.l.b16 %v565
  %v598 = vunpack.c.l.b16 %v566
  %v599 = vunpack.c.l.b16 %v567
  %v600 = vunpack.c.l.b16 %v568
  %v601 = vunpack.c.l.b16 %v569
  %v602 = vunpack.c.l.b16 %v570
  %v603 = vunpack.c.l.b16 %v571
  %v604 = vunpack.c.l.b16 %v572
  %v605 = vpack.c.b16 %v590, %v589
  %v606 = vpack.c.b16 %v592, %v591
  %v607 = vpack.c.b16 %v594, %v593
  %v608 = vpack.c.b16 %v596, %v595
  %v609 = vpack.c.b16 %v598, %v597
  %v610 = vpack.c.b16 %v600, %v599
  %v611 = vpack.c.b16 %v602, %v601
  %v612 = vpack.c.b16 %v604, %v603
  %621 = vmatprep.subr.bf16.mxu0 0
  %622 = vmatpush1.bf16.msra.mxu0 %v605
  %623 = vmatprep.subr.bf16.mxu0 0
  %624 = vmatpush1.bf16.msra.mxu0 %v606
  %625 = vmatprep.subr.bf16.mxu0 0
  %626 = vmatpush1.bf16.msra.mxu0 %v607
  %627 = vmatprep.subr.bf16.mxu0 0
  %628 = vmatpush1.bf16.msra.mxu0 %v608
  %629 = vmatprep.subr.bf16.mxu0 0
  %630 = vmatpush1.bf16.msra.mxu0 %v609
  %631 = vmatprep.subr.bf16.mxu0 0
  %632 = vmatpush1.bf16.msra.mxu0 %v610
  %633 = vmatprep.subr.bf16.mxu0 0
  %634 = vmatpush1.bf16.msra.mxu0 %v611
  %635 = vmatprep.subr.bf16.mxu0 0
  %636 = vmatpush1.bf16.msra.mxu0 %v612
  %637 = vmatprep.subr.bf16.mxu0 0
  %638 = vmatpush1.bf16.msra.mxu0 0
  %639 = vmatprep.subr.bf16.mxu0 0
  %640 = vmatpush1.bf16.msra.mxu0 0
  %641 = vmatprep.subr.bf16.mxu0 0
  %642 = vmatpush1.bf16.msra.mxu0 0
  %643 = vmatprep.subr.bf16.mxu0 0
  %644 = vmatpush1.bf16.msra.mxu0 0
  %645 = vmatprep.subr.bf16.mxu0 0
  %646 = vmatpush1.bf16.msra.mxu0 0
  %647 = vmatprep.subr.bf16.mxu0 0
  %648 = vmatpush1.bf16.msra.mxu0 0
  %649 = vmatprep.subr.bf16.mxu0 0
  %650 = vmatpush1.bf16.msra.mxu0 0
  %651 = vmatprep.subr.bf16.mxu0 0
  %652 = vmatpush1.bf16.msra.mxu0 0
  %653 = vmatprep.mubr.bf16.mxu0 0
  %654 = vmatmul.mubr.bf16.gmra.mrb[0].mxu0 %v434
  %v655 = vpop.f32.mrb[0].mxu0
  %v656 = vadd.f32 0.0, %v655
  %v657 = vpop.f32.mrb[0].mxu0
  %v658 = vpop.f32.mrb[0].mxu0
  %v659 = vadd.f32 0.0, %v658
  %v660 = vpop.f32.mrb[0].mxu0
  %661 = vmatprep.mubr.bf16.mxu0 0
  %662 = vmatmul.mubr.bf16.gmra.mrb[0].mxu0 %v435
  %v663 = vpop.f32.mrb[0].mxu0
  %v664 = vadd.f32 0.0, %v663
  %v665 = vpop.f32.mrb[0].mxu0
  %v666 = vpop.f32.mrb[0].mxu0
  %v667 = vadd.f32 0.0, %v666
  %v668 = vpop.f32.mrb[0].mxu0
  %669 = vmatprep.mubr.bf16.mxu0 0
  %670 = vmatmul.mubr.bf16.gmra.mrb[0].mxu0 %v436
  %v671 = vpop.f32.mrb[0].mxu0
  %v672 = vadd.f32 0.0, %v671
  %v673 = vpop.f32.mrb[0].mxu0
  %v674 = vpop.f32.mrb[0].mxu0
  %v675 = vadd.f32 0.0, %v674
  %v676 = vpop.f32.mrb[0].mxu0
  %677 = vdwg.mxu0
  %s678 = scalar_lea.vmem %s3, 128
  %v679 = vld [vmem:[%s678] sm:$0xf]
  %v680 = vld [vmem:[%s678 + $0x4] sm:$0xf]
  %v681 = vld [vmem:[%s678 + $0x8] sm:$0xf]
  %v682 = vld [vmem:[%s678 + $0xc] sm:$0xf]
  %v683 = vld [vmem:[%s678 + $0x10] sm:$0xf]
  %v684 = vld [vmem:[%s678 + $0x14] sm:$0xf]
  %v685 = vld [vmem:[%s678 + $0x18] sm:$0xf]
  %v686 = vld [vmem:[%s678 + $0x1c] sm:$0xf]
  %v687 = vld [vmem:[%s678 + $0x20] sm:$0xf]
  %v688 = vld [vmem:[%s678 + $0x24] sm:$0xf]
  %v689 = vld [vmem:[%s678 + $0x28] sm:$0xf]
  %v690 = vld [vmem:[%s678 + $0x2c] sm:$0xf]
  %v691 = vld [vmem:[%s678 + $0x30] sm:$0xf]
  %v692 = vld [vmem:[%s678 + $0x34] sm:$0xf]
  %v693 = vld [vmem:[%s678 + $0x38] sm:$0xf]
  %v694 = vld [vmem:[%s678 + $0x3c] sm:$0xf]
  %v711 = vunpack.c.l.b16 %v679
  %v712 = vunpack.c.l.b16 %v680
  %v713 = vunpack.c.l.b16 %v681
  %v714 = vunpack.c.l.b16 %v682
  %v715 = vunpack.c.l.b16 %v683
  %v716 = vunpack.c.l.b16 %v684
  %v717 = vunpack.c.l.b16 %v685
  %v718 = vunpack.c.l.b16 %v686
  %v719 = vunpack.c.l.b16 %v687
  %v720 = vunpack.c.l.b16 %v688
  %v721 = vunpack.c.l.b16 %v689
  %v722 = vunpack.c.l.b16 %v690
  %v723 = vunpack.c.l.b16 %v691
  %v724 = vunpack.c.l.b16 %v692
  %v725 = vunpack.c.l.b16 %v693
  %v726 = vunpack.c.l.b16 %v694
  %v727 = vpack.c.b16 %v712, %v711
  %v728 = vpack.c.b16 %v714, %v713
  %v729 = vpack.c.b16 %v716, %v715
  %v730 = vpack.c.b16 %v718, %v717
  %v731 = vpack.c.b16 %v720, %v719
  %v732 = vpack.c.b16 %v722, %v721
  %v733 = vpack.c.b16 %v724, %v723
  %v734 = vpack.c.b16 %v726, %v725
  %743 = vmatprep.subr.bf16.mxu0 0
  %744 = vmatpush1.bf16.msra.mxu0 %v727
  %745 = vmatprep.subr.bf16.mxu0 0
  %746 = vmatpush1.bf16.msra.mxu0 %v728
  %747 = vmatprep.subr.bf16.mxu0 0
  %748 = vmatpush1.bf16.msra.mxu0 %v729
  %749 = vmatprep.subr.bf16.mxu0 0
  %750 = vmatpush1.bf16.msra.mxu0 %v730
  %751 = vmatprep.subr.bf16.mxu0 0
  %752 = vmatpush1.bf16.msra.mxu0 %v731
  %753 = vmatprep.subr.bf16.mxu0 0
  %754 = vmatpush1.bf16.msra.mxu0 %v732
  %755 = vmatprep.subr.bf16.mxu0 0
  %756 = vmatpush1.bf16.msra.mxu0 %v733
  %757 = vmatprep.subr.bf16.mxu0 0
  %758 = vmatpush1.bf16.msra.mxu0 %v734
  %759 = vmatprep.subr.bf16.mxu0 0
  %760 = vmatpush1.bf16.msra.mxu0 0
  %761 = vmatprep.subr.bf16.mxu0 0
  %762 = vmatpush1.bf16.msra.mxu0 0
  %763 = vmatprep.subr.bf16.mxu0 0
  %764 = vmatpush1.bf16.msra.mxu0 0
  %765 = vmatprep.subr.bf16.mxu0 0
  %766 = vmatpush1.bf16.msra.mxu0 0
  %767 = vmatprep.subr.bf16.mxu0 0
  %768 = vmatpush1.bf16.msra.mxu0 0
  %769 = vmatprep.subr.bf16.mxu0 0
  %770 = vmatpush1.bf16.msra.mxu0 0
  %771 = vmatprep.subr.bf16.mxu0 0
  %772 = vmatpush1.bf16.msra.mxu0 0
  %773 = vmatprep.subr.bf16.mxu0 0
  %774 = vmatpush1.bf16.msra.mxu0 0
  %775 = vmatprep.mubr.bf16.mxu0 0
  %776 = vmatmul.mubr.bf16.gmra.mrb[0].mxu0 %v434
  %v777 = vpop.f32.mrb[0].mxu0
  %v778 = vadd.f32 0.0, %v777
  %v779 = vpop.f32.mrb[0].mxu0
  %v780 = vpop.f32.mrb[0].mxu0
  %v781 = vadd.f32 0.0, %v780
  %v782 = vpop.f32.mrb[0].mxu0
  %783 = vmatprep.mubr.bf16.mxu0 0
  %784 = vmatmul.mubr.bf16.gmra.mrb[0].mxu0 %v435
  %v785 = vpop.f32.mrb[0].mxu0
  %v786 = vadd.f32 0.0, %v785
  %v787 = vpop.f32.mrb[0].mxu0
  %v788 = vpop.f32.mrb[0].mxu0
  %v789 = vadd.f32 0.0, %v788
  %v790 = vpop.f32.mrb[0].mxu0
  %791 = vmatprep.mubr.bf16.mxu0 0
  %792 = vmatmul.mubr.bf16.gmra.mrb[0].mxu0 %v436
  %v793 = vpop.f32.mrb[0].mxu0
  %v794 = vadd.f32 0.0, %v793
  %v795 = vpop.f32.mrb[0].mxu0
  %v796 = vpop.f32.mrb[0].mxu0
  %v797 = vadd.f32 0.0, %v796
  %v798 = vpop.f32.mrb[0].mxu0
  %799 = vdwg.mxu0
  %v800 = vld [vmem:[%s4] sm:$0x1]
  %v802 = vlaneseq
  %v803 = vshrl.u32 %v802, 7
  %v804 = vsub.s32 0, %v803
  %v805 = vrot.slane %v800, %v804
  %v810 = vrot.slane %v656, 1
  %v811 = vrot.slane %v659, 1
  %v812 = vsel %vm335, %v810, %v811
  %v813 = vrot.slane %v664, 1
  %v814 = vsel %vm335, %v811, %v813
  %v817 = vadd.f32 %v536, %v812
  %v818 = vadd.f32 %v539, %v814
  %v822 = vrot.slane %v778, 2
  %v823 = vrot.slane %v781, 2
  %v824 = vsel %vm348, %v822, %v823
  %v825 = vrot.slane %v786, 2
  %v826 = vsel %vm348, %v823, %v825
  %v829 = vadd.f32 %v817, %v824
  %v830 = vadd.f32 %v818, %v826
  %v831 = vadd.f32 %v829, %v805
  %v832 = vadd.f32 %v830, %v805
  %vm833 = vcmp.gt.f32.partialorder %v831, 0.0
  %vm834 = vcmp.gt.f32.partialorder %v832, 0.0
  %v835 = vmin.f32 %v831, 0.0
  %v836 = vmin.f32 %v832, 0.0
  %v837 = vmul.f32 %v835, 1.442695
  %v838 = vpow.pop %v837
  %v839 = vmul.f32 %v836, 1.442695
  %v840 = vpow.pop %v839
  %v841 = vsub.f32 %v838, 1.0
  %v842 = vsub.f32 %v840, 1.0
  %v843 = vmul.f32 %v841, 1.6732632
  %v844 = vmul.f32 %v842, 1.6732632
  %v845 = vsel %vm833, %v831, %v843
  %v846 = vsel %vm834, %v832, %v844
  %v847 = vmul.f32 %v845, 1.050701
  %v848 = vmul.f32 %v846, 1.050701
  %v852 = vrot.slane %v667, 1
  %v853 = vrot.slane %v672, 1
  %v854 = vsel %vm335, %v852, %v853
  %v855 = vrot.slane %v675, 1
  %v856 = vsel %vm335, %v853, %v855
  %v859 = vadd.f32 %v546, %v854
  %v860 = vadd.f32 %v551, %v856
  %v864 = vrot.slane %v789, 2
  %v865 = vrot.slane %v794, 2
  %v866 = vsel %vm348, %v864, %v865
  %v867 = vrot.slane %v797, 2
  %v868 = vsel %vm348, %v865, %v867
  %v871 = vadd.f32 %v859, %v866
  %v872 = vadd.f32 %v860, %v868
  %v873 = vadd.f32 %v871, %v805
  %v874 = vadd.f32 %v872, %v805
  %vm875 = vcmp.gt.f32.partialorder %v873, 0.0
  %vm876 = vcmp.gt.f32.partialorder %v874, 0.0
  %v877 = vmin.f32 %v873, 0.0
  %v878 = vmin.f32 %v874, 0.0
  %v879 = vmul.f32 %v877, 1.442695
  %v880 = vpow.pop %v879
  %v881 = vmul.f32 %v878, 1.442695
  %v882 = vpow.pop %v881
  %v883 = vsub.f32 %v880, 1.0
  %v884 = vsub.f32 %v882, 1.0
  %v885 = vmul.f32 %v883, 1.6732632
  %v886 = vmul.f32 %v884, 1.6732632
  %v887 = vsel %vm875, %v873, %v885
  %v888 = vsel %vm876, %v874, %v886
  %v889 = vmul.f32 %v887, 1.050701
  %v890 = vmul.f32 %v888, 1.050701
  %891 = vst [vmem:[%s5] sm:$0xff] %v847
  %892 = vst [vmem:[%s5 + $0x8] sm:$0xff] %v848
  %s893 = scalar_lea.vmem %s5, 16
  %894 = vst [vmem:[%s893] sm:$0xff] %v889
  %895 = vst [vmem:[%s893 + $0x8] sm:$0xff] %v890
  // Predicated region
  $region22: #{unet_conv2_forward.1} parent=0 // pred_check
    _
  $region23: #{unet_conv2_forward.1} parent=0 // pred_check_branch
    %897 = sbr.rel (0) target = $region25
  $region24: #{unet_conv2_forward.1} parent=0 // pred_region
    _
  $region25: #{unet_conv2_forward.1} parent=0 // pred_fallthru
    _
  // Predicated region
  $region26: #{unet_conv2_forward.1} parent=0 // pred_check
    _
  $region27: #{unet_conv2_forward.1} parent=0 // pred_check_branch
    %899 = sbr.rel (0) target = $region29
  $region28: #{unet_conv2_forward.1} parent=0 // pred_region
    _
  $region29: #{unet_conv2_forward.1} parent=0 // pred_fallthru
    _

</llo_original>
